<compile_context>
chip_gen: v6e
topology: v6e:2x2x1
jax: 0.10.0
libtpu: 0.0.40
codegen_flags: <defaults>
</compile_context>

<pallas_src>
import math
import numpy as np
import jax
import jax.numpy as jnp
from jax.experimental import pallas as pl
from jax.experimental.pallas import tpu as pltpu

N_DIM = 32                 # n_dimesions in the PyTorch module
PACK = 128 // N_DIM        # logical rows packed per 128-lane row (= 4)
LANES = PACK * N_DIM       # = 128
EPS = 1e-6

# Unbiased-variance fold (exact):
#   std_unbiased = sqrt(c * var_biased),  c = N/(N-1)
#   alpha*(x-m)/(std+eps) = (alpha/sqrt(c)) * (x-m)/(sqrt(var_biased) + eps/sqrt(c))
_UNBIAS_FOLD = math.sqrt((N_DIM - 1) / N_DIM)   # = 1/sqrt(c)
_EPS_FOLDED = EPS * _UNBIAS_FOLD

# Block-diagonal segment-mean matrix (value 1/32 where i//32 == j//32), built
# once at module level in bf16 so each x @ seg is a single-pass bf16 MXU op.
_ids = np.arange(LANES) // N_DIM
_SEG = jnp.asarray(
    (_ids[:, None] == _ids[None, :]).astype(np.float32) / N_DIM,
    dtype=jnp.bfloat16)

_MIN_TM = 256        # min packed-row block (>= ~256 KiB HBM traffic per step)
_TARGET_STEPS = 8    # aim for >=8 grid steps (>=2 needed for megacore)


def _round_up(a, b):
    return ((a + b - 1) // b) * b


def layernorm_kernel(x_ref, seg_ref, alpha_ref, bias_ref, o_ref):
    # x_ref:     (tm, 128) tile; each 128-lane row holds PACK=4 independent
    #            32-element LayerNorm rows.
    # seg_ref:   (128, 128) bf16 block-diagonal 1/32 matrix -> x @ seg
    #            broadcasts each 32-lane segment mean back over its own lanes.
    # alpha_ref: (1, 128) gamma tiled across the 4 segments, pre-scaled by
    #            sqrt(31/32) (unbiased-std fold).
    # bias_ref:  (1, 128) beta tiled across the 4 segments.
    x = x_ref[...].astype(jnp.float32)
    seg = seg_ref[...]                                  # bf16, resident

    # Two independent single-pass bf16 MXU matmuls (f32 accumulation),
    # issued back-to-back; no serial dependence between them.
    mean = jnp.dot(x.astype(jnp.bfloat16), seg,
                   preferred_element_type=jnp.float32)
    ex2 = jnp.dot((x * x).astype(jnp.bfloat16), seg,
                  preferred_element_type=jnp.float32)

    d = x - mean
    # Biased variance; clamp tiny negatives from cancellation/rounding.
    var_b = jnp.maximum(ex2 - mean * mean, 0.0)
    # eps already divided by sqrt(32/31); 32/31 factor lives in alpha'.
    inv = pl.reciprocal(jnp.sqrt(var_b) + _EPS_FOLDED, approx=True)  # EUP slot
    y = d * inv * alpha_ref[...].astype(jnp.float32) \
        + bias_ref[...].astype(jnp.float32)
    o_ref[...] = y.astype(o_ref.dtype)


def _layer_norm_impl(x, alpha, bias, *, tm=2048):
    """tm = max packed-row tile (each packed row = 4 logical LayerNorm rows)."""
    orig_shape = x.shape
    assert orig_shape[-1] == N_DIM
    m = x.size // N_DIM                      # number of logical rows
    pad_rows = (-m) % PACK                   # normally 0 (batch*seq % 4 == 0)
    if pad_rows:
        x2 = jnp.pad(x.reshape(m, N_DIM), ((0, pad_rows), (0, 0)))
    else:
        x2 = x
    mp = (m + pad_rows) // PACK              # packed (128-lane) rows
    xp = x2.reshape(mp, LANES)               # lane-dense view

    # gamma / beta tiled across the 4 packed segments -> (1, 128); the exact
    # 32/31 unbiased-std factor is folded into alpha here (see _UNBIAS_FOLD).
    alpha_p = jnp.tile(alpha.reshape(1, N_DIM).astype(jnp.float32),
                       (1, PACK)) * _UNBIAS_FOLD
    bias_p = jnp.tile(bias.reshape(1, N_DIM).astype(jnp.float32), (1, PACK))

    # Tile selection: tiny inputs -> one full-extent block; otherwise split
    # into >=2 (target >=8) steps of >= _MIN_TM rows (multiples of 8), capped
    # at tm (default 2048 -> 1 MiB f32 per block, safe on v7x's 64 MiB VMEM).
    if mp <= _MIN_TM:
        tm_eff = mp
    else:
        tm_eff = min(tm, max(_MIN_TM,
                             _round_up(pl.cdiv(mp, _TARGET_STEPS), 8)))
    grid = (pl.cdiv(mp, tm_eff),)            # ragged tail masked by Pallas

    out = pl.pallas_call(
        layernorm_kernel,
        out_shape=jax.ShapeDtypeStruct((mp, LANES), x.dtype),
        grid_spec=pltpu.PrefetchScalarGridSpec(
            num_scalar_prefetch=0,
            grid=grid,
            in_specs=[
                pl.BlockSpec((tm_eff, LANES), lambda i: (i, 0)),
                pl.BlockSpec((LANES, LANES), lambda i: (0, 0)),   # seg (resident)
                pl.BlockSpec((1, LANES), lambda i: (0, 0)),       # alpha'
                pl.BlockSpec((1, LANES), lambda i: (0, 0)),       # bias
            ],
            out_specs=pl.BlockSpec((tm_eff, LANES), lambda i: (i, 0)),
        ),
        compiler_params=pltpu.CompilerParams(
            dimension_semantics=("parallel",),
            # Explicit budget: 2x(in+out) double-buffered blocks (~4 MiB at
            # tm=2048) + full-tile f32 temporaries; well under 32 MiB on all
            # of v5e/v6e/v7x.
            vmem_limit_bytes=32 * 1024 * 1024,
        ),
    )(xp, _SEG, alpha_p, bias_p)

    if pad_rows:
        out = out.reshape(-1, N_DIM)[:m]
    return out.reshape(orig_shape)


# Jit the wrapper so pad/reshape/tile fuse and module-level constants (seg)
# are baked in rather than re-dispatched / re-uploaded per call.
layer_norm = jax.jit(_layer_norm_impl, static_argnames=("tm",))


def layer_norm_ref(x, alpha, bias):
    mean = jnp.mean(x, axis=-1, keepdims=True)
    d = x - mean
    var = jnp.sum(d * d, axis=-1, keepdims=True) / (x.shape[-1] - 1)
    std = jnp.sqrt(var)
    return alpha * d / (std + EPS) + bias


if __name__ == "__main__":
    key = jax.random.PRNGKey(0)
    batch, seq = 2, 8
    x = jax.random.normal(key, (batch, seq, N_DIM), dtype=jnp.float32)

    # nn.Parameter(torch.ones(32)) / nn.Parameter(torch.zeros(32))
    alpha = jnp.ones((N_DIM,), dtype=jnp.float32)
    bias = jnp.zeros((N_DIM,), dtype=jnp.float32)

    out = jax.block_until_ready(layer_norm(x, alpha, bias))
    ref = layer_norm_ref(x, alpha, bias)
    assert out.shape == x.shape
    # Tolerance covers the bf16 MXU segment reductions (~2^-9 relative error on
    # mean/var, per the perf review) plus the EUP approximate reciprocal.
    assert jnp.allclose(out, ref, atol=5e-3, rtol=1e-2), (
        float(jnp.max(jnp.abs(out - ref))))

    # Also exercise the multi-step grid path (mp > _MIN_TM -> >=2 grid steps).
    x2 = jax.random.normal(jax.random.PRNGKey(1), (8, 512, N_DIM),
                           dtype=jnp.float32)
    out2 = jax.block_until_ready(layer_norm(x2, alpha, bias))
    ref2 = layer_norm_ref(x2, alpha, bias)
    assert out2.shape == x2.shape
    assert jnp.allclose(out2, ref2, atol=5e-3, rtol=1e-2), (
        float(jnp.max(jnp.abs(out2 - ref2))))

    print("KERNEL_OK")
</pallas_src>

<mosaic_0001>
module attributes {stable_mosaic.version = 11 : i64} {
  func.func @layernorm_kernel(%arg0: i32, %arg1: memref<4x128xf32, #tpu.memory_space<vmem>>, %arg2: memref<128x128xbf16, #tpu.memory_space<vmem>>, %arg3: memref<1x128xf32, #tpu.memory_space<vmem>>, %arg4: memref<1x128xf32, #tpu.memory_space<vmem>>, %arg5: memref<4x128xf32, #tpu.memory_space<vmem>>) attributes {dimension_semantics = [#tpu.dimension_semantics<parallel>], iteration_bounds = array<i64: 1>, scalar_prefetch = 0 : i64, scratch_operands = 0 : i64, tpu.core_type = #tpu.core_type<tc>, window_params = [{transform_indices = @transform_0, window_bounds = array<i64: 4, 128>}, {pipeline_mode = #tpu.pipeline_mode<synchronous>, transform_indices = @transform_1, window_bounds = array<i64: 128, 128>}, {pipeline_mode = #tpu.pipeline_mode<synchronous>, transform_indices = @transform_2, window_bounds = array<i64: 1, 128>}, {pipeline_mode = #tpu.pipeline_mode<synchronous>, transform_indices = @transform_3, window_bounds = array<i64: 1, 128>}, {transform_indices = @transform_4, window_bounds = array<i64: 4, 128>}]} {
    %c0 = arith.constant 0 : index
    %c0_0 = arith.constant 0 : index
    %0 = vector.load %arg1[%c0, %c0_0] : memref<4x128xf32, #tpu.memory_space<vmem>>, vector<4x128xf32>
    %c0_1 = arith.constant 0 : index
    %c0_2 = arith.constant 0 : index
    %1 = vector.load %arg2[%c0_1, %c0_2] : memref<128x128xbf16, #tpu.memory_space<vmem>>, vector<128x128xbf16>
    %2 = arith.truncf %0 : vector<4x128xf32> to vector<4x128xbf16>
    %cst = arith.constant dense<0.000000e+00> : vector<4x128xf32>
    %3 = tpu.matmul %2, %1, %cst {dimension_numbers = #tpu.dot_dimension_numbers<[1], [0], [0], [1], [0, 0, 1, 1], [], []>} : vector<4x128xbf16>, vector<128x128xbf16>, vector<4x128xf32> -> vector<4x128xf32>
    %4 = arith.mulf %0, %0 : vector<4x128xf32>
    %5 = arith.truncf %4 : vector<4x128xf32> to vector<4x128xbf16>
    %cst_3 = arith.constant dense<0.000000e+00> : vector<4x128xf32>
    %6 = tpu.matmul %5, %1, %cst_3 {dimension_numbers = #tpu.dot_dimension_numbers<[1], [0], [0], [1], [0, 0, 1, 1], [], []>} : vector<4x128xbf16>, vector<128x128xbf16>, vector<4x128xf32> -> vector<4x128xf32>
    %7 = arith.subf %0, %3 : vector<4x128xf32>
    %8 = arith.mulf %3, %3 : vector<4x128xf32>
    %9 = arith.subf %6, %8 : vector<4x128xf32>
    %cst_4 = arith.constant 0.000000e+00 : f32
    %10 = vector.broadcast %cst_4 : f32 to vector<4x128xf32>
    %11 = arith.maximumf %9, %10 : vector<4x128xf32>
    %12 = math.sqrt %11 : vector<4x128xf32>
    %cst_5 = arith.constant 9.8425096E-7 : f32
    %13 = vector.broadcast %cst_5 : f32 to vector<4x128xf32>
    %14 = arith.addf %12, %13 : vector<4x128xf32>
    %15 = tpu.reciprocal %14 {approx = true} : vector<4x128xf32> -> vector<4x128xf32>
    %16 = arith.mulf %7, %15 : vector<4x128xf32>
    %c0_6 = arith.constant 0 : index
    %c0_7 = arith.constant 0 : index
    %17 = vector.load %arg3[%c0_6, %c0_7] : memref<1x128xf32, #tpu.memory_space<vmem>>, vector<1x128xf32>
    %18 = vector.broadcast %17 : vector<1x128xf32> to vector<4x128xf32>
    %19 = arith.mulf %16, %18 : vector<4x128xf32>
    %c0_8 = arith.constant 0 : index
    %c0_9 = arith.constant 0 : index
    %20 = vector.load %arg4[%c0_8, %c0_9] : memref<1x128xf32, #tpu.memory_space<vmem>>, vector<1x128xf32>
    %21 = vector.broadcast %20 : vector<1x128xf32> to vector<4x128xf32>
    %22 = arith.addf %19, %21 : vector<4x128xf32>
    %c0_10 = arith.constant 0 : index
    %c0_11 = arith.constant 0 : index
    %23 = vector.load %arg5[%c0_10, %c0_11] : memref<4x128xf32, #tpu.memory_space<vmem>>, vector<4x128xf32>
    tpu.vector_store %arg5[%c0_10, %c0_11], %22 {strides = array<i32>} : memref<4x128xf32, #tpu.memory_space<vmem>>, vector<4x128xf32>,
    return
  }
  func.func @transform_0(%arg0: i32) -> (i32, i32) {
    %c0_i32 = arith.constant 0 : i32
    %c0_i32_0 = arith.constant 0 : i32
    return %arg0, %c0_i32 : i32, i32
  }
  func.func @transform_1(%arg0: i32) -> (i32, i32) {
    %c0_i32 = arith.constant 0 : i32
    %c0_i32_0 = arith.constant 0 : i32
    %c0_i32_1 = arith.constant 0 : i32
    return %c0_i32, %c0_i32_0 : i32, i32
  }
  func.func @transform_2(%arg0: i32) -> (i32, i32) {
    %c0_i32 = arith.constant 0 : i32
    %c0_i32_0 = arith.constant 0 : i32
    %c0_i32_1 = arith.constant 0 : i32
    return %c0_i32, %c0_i32_0 : i32, i32
  }
  func.func @transform_3(%arg0: i32) -> (i32, i32) {
    %c0_i32 = arith.constant 0 : i32
    %c0_i32_0 = arith.constant 0 : i32
    %c0_i32_1 = arith.constant 0 : i32
    return %c0_i32, %c0_i32_0 : i32, i32
  }
  func.func @transform_4(%arg0: i32) -> (i32, i32) {
    %c0_i32 = arith.constant 0 : i32
    %c0_i32_0 = arith.constant 0 : i32
    return %arg0, %c0_i32 : i32, i32
  }
}

</mosaic_0001>

<llo_original>
// kernel: _layer_norm_impl.1
$region0: #{_layer_norm_impl.1}
  #allocation0 [shape = 'u32[]', space=smem, size = 0x4, offset = 0x4, fixed_abs, tag = 'smem constant byte address 0x4 - core index']
  #allocation1 [shape = 'u32[144,128]{1,0:T(1,128)}', space=vmem, size = 0x12000, scoped, tag = 'internal scratch']
  %s0 = inlined_call_operand.vmem [shape: f32[4,128], index: 0, kind: input, shape index: {}]
  %s1 = inlined_call_operand.hbm [shape: bf16[128,128], index: 1, kind: input, shape index: {}]
  %s2 = inlined_call_operand.vmem [shape: f32[1,128], index: 2, kind: input, shape index: {}]
  %s3 = inlined_call_operand.vmem [shape: f32[1,128], index: 3, kind: input, shape index: {}]
  %s4 = inlined_call_operand.vmem [shape: f32[4,128], index: 4, kind: output, shape index: {}]
  %s5 = sld [smem:[#allocation0]]
  $region30: #{_layer_norm_impl.1} parent=0
    _
  %s7 = ssub.s32 1, %s5
  %s8 = scalar_select 0, %s7, %s5
  $region1: #{_layer_norm_impl.1} parent=0
    #allocation2 [shape = 'u8[32768]{0}', space=vmem, size = 0x8000, scoped, tag = 'input window, operand 1, single buffered']
    #allocation3 [shape = 's32[1]{0}', space=sflag, size = 0x4, scoped, tag = 'scoped memory for _layer_norm_impl.1']
    %9 = vsyncpa [#allocation3], 0
    // Predicated region
    $region2: #{_layer_norm_impl.1} parent=1 // pred_check
      _
    $region3: #{_layer_norm_impl.1} parent=1 // pred_check_branch
      %11 = sbr.rel (0) target = $region5
    $region4: #{_layer_norm_impl.1} parent=1 // pred_region
      _
    $region5: #{_layer_norm_impl.1} parent=1 // pred_fallthru
      _
    // Predicated region
    $region6: #{_layer_norm_impl.1} parent=1 // pred_check
      _
    $region7: #{_layer_norm_impl.1} parent=1 // pred_check_branch
      %13 = sbr.rel (0) target = $region9
    $region8: #{_layer_norm_impl.1} parent=1 // pred_region
      %s15 = ssub.s32 1024, 1024
      %16 = vsyncadd [#allocation3], %s15
      %s17 = sshll.u32 [#allocation2], 4
      %s18 = int_to_ptr.vmem [resolvable:$true] %s17
      %23 = dma.hbm_to_vmem [thread:$0]  %s1, 1024, %s18, [#allocation3], 64, 64, 4
    $region9: #{_layer_norm_impl.1} parent=1 // pred_fallthru
      _
    // Predicated region
    $region10: #{_layer_norm_impl.1} parent=1 // pred_check
      _
    $region11: #{_layer_norm_impl.1} parent=1 // pred_check_branch
      %25 = sbr.rel (0) target = $region13
    $region12: #{_layer_norm_impl.1} parent=1 // pred_region
      _
    $region13: #{_layer_norm_impl.1} parent=1 // pred_fallthru
      _
    // Predicated region
    $region14: #{_layer_norm_impl.1} parent=1 // pred_check
      _
    $region15: #{_layer_norm_impl.1} parent=1 // pred_check_branch
      %27 = sbr.rel (0) target = $region17
    $region16: #{_layer_norm_impl.1} parent=1 // pred_region
      _
    $region17: #{_layer_norm_impl.1} parent=1 // pred_fallthru
      _
    // Predicated region
    $region18: #{_layer_norm_impl.1} parent=1 // pred_check
      _
    $region19: #{_layer_norm_impl.1} parent=1 // pred_check_branch
      %29 = sbr.rel (0) target = $region21
    $region20: #{_layer_norm_impl.1} parent=1 // pred_region
      %30 = dma.done [#allocation3], 1024
    $region21: #{_layer_norm_impl.1} parent=1 // pred_fallthru
      _
    %v32 = vld [vmem:[%s0] sm:$0xf]
    %v33 = vld [vmem:[#allocation2] sm:$0xf]
    %v34 = vld [vmem:[#allocation2 + $0x4] sm:$0xf]
    %v35 = vld [vmem:[#allocation2 + $0x8] sm:$0xf]
    %v36 = vld [vmem:[#allocation2 + $0xc] sm:$0xf]
    %v37 = vld [vmem:[#allocation2 + $0x10] sm:$0xf]
    %v38 = vld [vmem:[#allocation2 + $0x14] sm:$0xf]
    %v39 = vld [vmem:[#allocation2 + $0x18] sm:$0xf]
    %v40 = vld [vmem:[#allocation2 + $0x1c] sm:$0xf]
    %v41 = vld [vmem:[#allocation2 + $0x20] sm:$0xf]
    %v42 = vld [vmem:[#allocation2 + $0x24] sm:$0xf]
    %v43 = vld [vmem:[#allocation2 + $0x28] sm:$0xf]
    %v44 = vld [vmem:[#allocation2 + $0x2c] sm:$0xf]
    %v45 = vld [vmem:[#allocation2 + $0x30] sm:$0xf]
    %v46 = vld [vmem:[#allocation2 + $0x34] sm:$0xf]
    %v47 = vld [vmem:[#allocation2 + $0x38] sm:$0xf]
    %v48 = vld [vmem:[#allocation2 + $0x3c] sm:$0xf]
    %v49 = vpack.c.bf16 %v32, %v32
    %v66 = vunpack.c.l.b16 %v33
    %v67 = vunpack.c.l.b16 %v34
    %v68 = vunpack.c.l.b16 %v35
    %v69 = vunpack.c.l.b16 %v36
    %v70 = vunpack.c.l.b16 %v37
    %v71 = vunpack.c.l.b16 %v38
    %v72 = vunpack.c.l.b16 %v39
    %v73 = vunpack.c.l.b16 %v40
    %v74 = vunpack.c.l.b16 %v41
    %v75 = vunpack.c.l.b16 %v42
    %v76 = vunpack.c.l.b16 %v43
    %v77 = vunpack.c.l.b16 %v44
    %v78 = vunpack.c.l.b16 %v45
    %v79 = vunpack.c.l.b16 %v46
    %v80 = vunpack.c.l.b16 %v47
    %v81 = vunpack.c.l.b16 %v48
    %v82 = vpack.c.b16 %v67, %v66
    %v83 = vpack.c.b16 %v69, %v68
    %v84 = vpack.c.b16 %v71, %v70
    %v85 = vpack.c.b16 %v73, %v72
    %v86 = vpack.c.b16 %v75, %v74
    %v87 = vpack.c.b16 %v77, %v76
    %v88 = vpack.c.b16 %v79, %v78
    %v89 = vpack.c.b16 %v81, %v80
    %98 = vmatprep.subr.bf16.mxu0 0
    %99 = vmatpush1.bf16.msra.mxu0 %v89
    %100 = vmatprep.subr.bf16.mxu0 0
    %101 = vmatpush1.bf16.msra.mxu0 %v88
    %102 = vmatprep.subr.bf16.mxu0 0
    %103 = vmatpush1.bf16.msra.mxu0 %v87
    %104 = vmatprep.subr.bf16.mxu0 0
    %105 = vmatpush1.bf16.msra.mxu0 %v86
    %106 = vmatprep.subr.bf16.mxu0 0
    %107 = vmatpush1.bf16.msra.mxu0 %v85
    %108 = vmatprep.subr.bf16.mxu0 0
    %109 = vmatpush1.bf16.msra.mxu0 %v84
    %110 = vmatprep.subr.bf16.mxu0 0
    %111 = vmatpush1.bf16.msra.mxu0 %v83
    %112 = vmatprep.subr.bf16.mxu0 0
    %113 = vmatpush1.bf16.msra.mxu0 %v82
    %114 = vmatprep.subr.bf16.mxu0 0
    %115 = vmatpush2.bf16.msra.mxu0 0
    %116 = vmatprep.subr.bf16.mxu0 0
    %117 = vmatpush2.bf16.msra.mxu0 0
    %118 = vmatprep.subr.bf16.mxu0 0
    %119 = vmatpush2.bf16.msra.mxu0 0
    %120 = vmatprep.subr.bf16.mxu0 0
    %121 = vmatpush2.bf16.msra.mxu0 0
    %122 = vmatprep.subr.bf16.mxu0 0
    %123 = vmatpush2.bf16.msra.mxu0 0
    %124 = vmatprep.subr.bf16.mxu0 0
    %125 = vmatpush2.bf16.msra.mxu0 0
    %126 = vmatprep.subr.bf16.mxu0 0
    %127 = vmatpush2.bf16.msra.mxu0 0
    %128 = vmatprep.subr.bf16.mxu0 0
    %129 = vmatpush2.bf16.msra.mxu0 0
    %130 = vmatprep.mubr.bf16.mxu0 0
    %131 = vmatmul.mubr.bf16.gmra.mxu0 %v49
    %v132 = vpop.f32.mrf.mxu0
    %v133 = vadd.f32 0.0, %v132
    %v134 = vpop.f32.mrf.mxu0
    %v135 = vpop.f32.mrf.mxu0
    %v136 = vpop.f32.mrf.mxu0
    %137 = vdwg.mxu0
    %v138 = vmul.f32 %v32, %v32
    %v139 = vpack.c.bf16 %v138, %v138
    %140 = vmatprep.subr.bf16.mxu0 0
    %141 = vmatpush1.bf16.msra.mxu0 %v89
    %142 = vmatprep.subr.bf16.mxu0 0
    %143 = vmatpush1.bf16.msra.mxu0 %v88
    %144 = vmatprep.subr.bf16.mxu0 0
    %145 = vmatpush1.bf16.msra.mxu0 %v87
    %146 = vmatprep.subr.bf16.mxu0 0
    %147 = vmatpush1.bf16.msra.mxu0 %v86
    %148 = vmatprep.subr.bf16.mxu0 0
    %149 = vmatpush1.bf16.msra.mxu0 %v85
    %150 = vmatprep.subr.bf16.mxu0 0
    %151 = vmatpush1.bf16.msra.mxu0 %v84
    %152 = vmatprep.subr.bf16.mxu0 0
    %153 = vmatpush1.bf16.msra.mxu0 %v83
    %154 = vmatprep.subr.bf16.mxu0 0
    %155 = vmatpush1.bf16.msra.mxu0 %v82
    %156 = vmatprep.subr.bf16.mxu0 0
    %157 = vmatpush2.bf16.msra.mxu0 0
    %158 = vmatprep.subr.bf16.mxu0 0
    %159 = vmatpush2.bf16.msra.mxu0 0
    %160 = vmatprep.subr.bf16.mxu0 0
    %161 = vmatpush2.bf16.msra.mxu0 0
    %162 = vmatprep.subr.bf16.mxu0 0
    %163 = vmatpush2.bf16.msra.mxu0 0
    %164 = vmatprep.subr.bf16.mxu0 0
    %165 = vmatpush2.bf16.msra.mxu0 0
    %166 = vmatprep.subr.bf16.mxu0 0
    %167 = vmatpush2.bf16.msra.mxu0 0
    %168 = vmatprep.subr.bf16.mxu0 0
    %169 = vmatpush2.bf16.msra.mxu0 0
    %170 = vmatprep.subr.bf16.mxu0 0
    %171 = vmatpush2.bf16.msra.mxu0 0
    %172 = vmatprep.mubr.bf16.mxu0 0
    %173 = vmatmul.mubr.bf16.gmra.mxu0 %v139
    %v174 = vpop.f32.mrf.mxu0
    %v175 = vadd.f32 0.0, %v174
    %v176 = vpop.f32.mrf.mxu0
    %v177 = vpop.f32.mrf.mxu0
    %v178 = vpop.f32.mrf.mxu0
    %179 = vdwg.mxu0
    %v180 = vsub.f32 %v32, %v133
    %v181 = vmul.f32 %v133, %v133
    %v182 = vsub.f32 %v175, %v181
    %v183 = vmax.f32 %v182, 0.0
    %v184 = vrsqrt.pop %v183
    %v185 = vmul.f32 %v183, %v184
    %vm186 = vcmp.eq.f32.partialorder %v183, inf
    %v187 = vsel %vm186, %v183, %v185
    %vm188 = vcmp.eq.f32.partialorder %v183, 0.0
    %v189 = vand.u32 %v183, 2147483648
    %v190 = vsel %vm188, %v189, %v187
    %v191 = vadd.f32 %v190, 9.84251e-07
    %v192 = vrcp.pop %v191
    %v193 = vmul.f32 %v180, %v192
    %v194 = vld [vmem:[%s2] sm:$0x1]
    %v196 = vlaneseq
    %v197 = vshrl.u32 %v196, 7
    %v198 = vsub.s32 0, %v197
    %v199 = vrot.slane %v194, %v198
    %v201 = vmul.f32 %v193, %v199
    %v202 = vld [vmem:[%s3] sm:$0x1]
    %v204 = vlaneseq
    %v205 = vshrl.u32 %v204, 7
    %v206 = vsub.s32 0, %v205
    %v207 = vrot.slane %v202, %v206
    %v209 = vadd.f32 %v201, %v207
    %210 = vst [vmem:[%s4] sm:$0xf] %v209
    // Predicated region
    $region22: #{_layer_norm_impl.1} parent=1 // pred_check
      _
    $region23: #{_layer_norm_impl.1} parent=1 // pred_check_branch
      %212 = sbr.rel (0) target = $region25
    $region24: #{_layer_norm_impl.1} parent=1 // pred_region
      _
    $region25: #{_layer_norm_impl.1} parent=1 // pred_fallthru
      _
    // Predicated region
    $region26: #{_layer_norm_impl.1} parent=1 // pred_check
      _
    $region27: #{_layer_norm_impl.1} parent=1 // pred_check_branch
      %214 = sbr.rel (0) target = $region29
    $region28: #{_layer_norm_impl.1} parent=1 // pred_region
      _
    $region29: #{_layer_norm_impl.1} parent=1 // pred_fallthru
      _
    %215 = vsyncpa [#allocation3], 1

</llo_original>
